<compile_context>
chip_gen: v6e
topology: v6e:2x2x1
jax: 0.10.0
libtpu: 0.0.40
codegen_flags: <defaults>
</compile_context>

<pallas_src>
import jax
import jax.numpy as jnp
import numpy as np
from jax.experimental import pallas as pl
from jax.experimental.pallas import tpu as pltpu


# ----------------------------------------------------------------------------
# Kernel: one grid step adds a (1, bn) slice of the pe table onto a (bm, bn)
# block of batch rows (sublane-broadcast over the batch axis).
# ----------------------------------------------------------------------------
def add_pe_kernel(x_ref, pe_ref, o_ref):
    o_ref[...] = x_ref[...] + pe_ref[...]


# ----------------------------------------------------------------------------
# Buffer construction (equivalent of PositionalEncoding.__init__).
# ----------------------------------------------------------------------------
def make_pe_table(d_model, max_len=500, dtype=jnp.float32):
    position = np.arange(max_len, dtype=np.float32)[:, None]              # (L, 1)
    div_term = np.exp(
        np.arange(0, d_model, 2, dtype=np.float32) * (-np.log(10000.0) / d_model))
    pe = np.zeros((max_len, d_model), dtype=np.float32)
    pe[:, 0::2] = np.sin(position * div_term)
    pe[:, 1::2] = np.cos(position * div_term)
    return jnp.asarray(pe, dtype=dtype)                                   # (L, D)


# ----------------------------------------------------------------------------
# Tile-size helpers: always 8-/128-multiples (or full dim when smaller).
# ----------------------------------------------------------------------------
def _row_block(B, cap=256):
    # Multiple of 8 sublanes that is <= B; full batch when B < 8.
    if B >= 8:
        return min(cap, (B // 8) * 8)
    return B


def _lane_block(N, target_bytes, bm, itemsize):
    # Multiple of 128 lanes that is <= N, sized so bm*bn*itemsize ~= target.
    if N < 128:
        return N
    cap = max(128, (target_bytes // (bm * itemsize)) // 128 * 128)
    return min(cap, (N // 128) * 128)


# ----------------------------------------------------------------------------
# Wrapper: flatten (S, D) -> lane axis, tile rows / lanes, call pallas_call.
# ----------------------------------------------------------------------------
def positional_encoding(x, pe_table, *, donate_x=False):
    """forward(x) = x + pe[:, :x.shape[1]] for x of shape (B, S, D)."""
    B, S, D = x.shape
    assert S <= pe_table.shape[0], "sequence length exceeds max_len of pe table"
    N = S * D
    itemsize = jnp.dtype(x.dtype).itemsize

    # Lane-dense layout: row-major (S, D) -> S*D keeps x / pe indices aligned
    # and makes the output stores wide unmasked vst.
    x2 = x.reshape(B, N)
    pe2 = pe_table[:S].astype(x.dtype).reshape(1, N)   # fuses under jit

    # Target ~4 MiB of x per block: amortizes per-step overhead while the
    # double-buffered working set fits every generation's VMEM.
    bm = _row_block(B, cap=256)
    bn = _lane_block(N, target_bytes=4 << 20, bm=bm, itemsize=itemsize)

    # 2x(x in) + 2x(out) + 2x(pe) double buffers, plus headroom.
    vmem_limit = min(int(4 * bm * bn * itemsize + 2 * bn * itemsize) + (8 << 20),
                     40 << 20)

    # Lanes outer, rows inner: pe's block index (0, j) is constant across the
    # inner (row) axis, so pe is pulled from HBM once per lane block instead of
    # once per grid step.
    grid = (pl.cdiv(N, bn), pl.cdiv(B, bm))

    out = pl.pallas_call(
        add_pe_kernel,
        out_shape=jax.ShapeDtypeStruct((B, N), x.dtype),
        grid_spec=pltpu.PrefetchScalarGridSpec(
            num_scalar_prefetch=0,
            grid=grid,
            in_specs=[
                pl.BlockSpec((bm, bn), lambda j, i: (i, j)),   # x block
                pl.BlockSpec((1, bn), lambda j, i: (0, j)),    # pe (row broadcast)
            ],
            out_specs=pl.BlockSpec((bm, bn), lambda j, i: (i, j)),
        ),
        compiler_params=pltpu.CompilerParams(
            dimension_semantics=("parallel", "parallel"),
            vmem_limit_bytes=vmem_limit),
        input_output_aliases=({0: 0} if donate_x else {}),
    )(x2, pe2)

    return out.reshape(B, S, D)


# ----------------------------------------------------------------------------
# Pure-JAX reference (mirrors the PyTorch forward exactly).
# ----------------------------------------------------------------------------
def reference(x, pe_table):
    S = x.shape[1]
    return x + pe_table[None, :S, :].astype(x.dtype)


if __name__ == "__main__":
    B, S, D = 2, 8, 32        # batch, sequence length, d_model
    MAX_LEN = 500

    key = jax.random.PRNGKey(0)
    x = jax.random.normal(key, (B, S, D), jnp.float32)

    pe_table = make_pe_table(D, MAX_LEN)

    fwd = jax.jit(positional_encoding)   # hoists pe slice/reshape into the trace
    out = jax.block_until_ready(fwd(x, pe_table))

    ref = jax.block_until_ready(reference(x, pe_table))
    assert out.shape == (B, S, D)
    np.testing.assert_allclose(np.asarray(out), np.asarray(ref),
                               rtol=1e-6, atol=1e-6)

    print("KERNEL_OK")
</pallas_src>

<mosaic_0001>
module attributes {stable_mosaic.version = 11 : i64} {
  func.func @add_pe_kernel(%arg0: i32, %arg1: i32, %arg2: memref<2x256xf32, #tpu.memory_space<vmem>>, %arg3: memref<1x256xf32, #tpu.memory_space<vmem>>, %arg4: memref<2x256xf32, #tpu.memory_space<vmem>>) attributes {dimension_semantics = [#tpu.dimension_semantics<parallel>, #tpu.dimension_semantics<parallel>], iteration_bounds = array<i64: 1, 1>, scalar_prefetch = 0 : i64, scratch_operands = 0 : i64, tpu.core_type = #tpu.core_type<tc>, window_params = [{transform_indices = @transform_0, window_bounds = array<i64: 2, 256>}, {transform_indices = @transform_1, window_bounds = array<i64: 1, 256>}, {transform_indices = @transform_2, window_bounds = array<i64: 2, 256>}]} {
    %c0 = arith.constant 0 : index
    %c0_0 = arith.constant 0 : index
    %0 = vector.load %arg2[%c0, %c0_0] : memref<2x256xf32, #tpu.memory_space<vmem>>, vector<2x256xf32>
    %c0_1 = arith.constant 0 : index
    %c0_2 = arith.constant 0 : index
    %1 = vector.load %arg3[%c0_1, %c0_2] : memref<1x256xf32, #tpu.memory_space<vmem>>, vector<1x256xf32>
    %2 = vector.broadcast %1 : vector<1x256xf32> to vector<2x256xf32>
    %3 = arith.addf %0, %2 : vector<2x256xf32>
    %c0_3 = arith.constant 0 : index
    %c0_4 = arith.constant 0 : index
    %4 = vector.load %arg4[%c0_3, %c0_4] : memref<2x256xf32, #tpu.memory_space<vmem>>, vector<2x256xf32>
    tpu.vector_store %arg4[%c0_3, %c0_4], %3 {strides = array<i32>} : memref<2x256xf32, #tpu.memory_space<vmem>>, vector<2x256xf32>,
    return
  }
  func.func @transform_0(%arg0: i32, %arg1: i32) -> (i32, i32) {
    %c0_i32 = arith.constant 0 : i32
    return %arg1, %arg0 : i32, i32
  }
  func.func @transform_1(%arg0: i32, %arg1: i32) -> (i32, i32) {
    %c0_i32 = arith.constant 0 : i32
    %c0_i32_0 = arith.constant 0 : i32
    return %c0_i32, %arg0 : i32, i32
  }
  func.func @transform_2(%arg0: i32, %arg1: i32) -> (i32, i32) {
    %c0_i32 = arith.constant 0 : i32
    return %arg1, %arg0 : i32, i32
  }
}

</mosaic_0001>

<llo_original>
// kernel: positional_encoding.1
$region0: #{positional_encoding.1}
  #allocation0 [shape = 'u32[]', space=smem, size = 0x4, offset = 0x4, fixed_abs, tag = 'smem constant byte address 0x4 - core index']
  #allocation1 [shape = 'u32[144,128]{1,0:T(1,128)}', space=vmem, size = 0x12000, scoped, tag = 'internal scratch']
  %s0 = inlined_call_operand.vmem [shape: f32[2,256], index: 0, kind: input, shape index: {}]
  %s1 = inlined_call_operand.vmem [shape: f32[1,256], index: 1, kind: input, shape index: {}]
  %s2 = inlined_call_operand.vmem [shape: f32[2,256], index: 2, kind: output, shape index: {}]
  %s3 = sld [smem:[#allocation0]]
  $region18: #{positional_encoding.1} parent=0
    _
  %s5 = ssub.s32 1, %s3
  %s6 = scalar_select 0, %s5, %s3
  // Predicated region
  $region2: #{positional_encoding.1} parent=0 // pred_check
    _
  $region3: #{positional_encoding.1} parent=0 // pred_check_branch
    %8 = sbr.rel (0) target = $region5
  $region4: #{positional_encoding.1} parent=0 // pred_region
    _
  $region5: #{positional_encoding.1} parent=0 // pred_fallthru
    _
  // Predicated region
  $region6: #{positional_encoding.1} parent=0 // pred_check
    _
  $region7: #{positional_encoding.1} parent=0 // pred_check_branch
    %10 = sbr.rel (0) target = $region9
  $region8: #{positional_encoding.1} parent=0 // pred_region
    _
  $region9: #{positional_encoding.1} parent=0 // pred_fallthru
    _
  %v11 = vld [vmem:[%s0] sm:$0xf]
  %v12 = vld [vmem:[%s1] sm:$0x3]
  %v14 = vlaneseq
  %v15 = vshrl.u32 %v14, 7
  %v16 = vsub.s32 0, %v15
  %v17 = vrot.slane %v12, %v16
  %v18 = vlaneseq
  %v19 = vshrl.u32 %v18, 7
  %v20 = vsub.s32 1, %v19
  %v21 = vrot.slane %v12, %v20
  %v22 = vcombine.low %v17, %v21
  %v24 = vunpack.c.l.s4 1983009808
  %v25 = vunpack.c.0.s8 %v24
  %v26 = vlaneseq
  %v27 = vshrl.u32 %v26, 7
  %v28 = vsub.s32 %v25, %v27
  %v29 = vrot.slane %v22, %v28
  %v31 = vadd.f32 %v11, %v29
  %32 = vst [vmem:[%s2] sm:$0xf] %v31
  // Predicated region
  $region10: #{positional_encoding.1} parent=0 // pred_check
    _
  $region11: #{positional_encoding.1} parent=0 // pred_check_branch
    %34 = sbr.rel (0) target = $region13
  $region12: #{positional_encoding.1} parent=0 // pred_region
    _
  $region13: #{positional_encoding.1} parent=0 // pred_fallthru
    _
  // Predicated region
  $region14: #{positional_encoding.1} parent=0 // pred_check
    _
  $region15: #{positional_encoding.1} parent=0 // pred_check_branch
    %36 = sbr.rel (0) target = $region17
  $region16: #{positional_encoding.1} parent=0 // pred_region
    _
  $region17: #{positional_encoding.1} parent=0 // pred_fallthru
    _

</llo_original>
